<compile_context>
chip_gen: v5e
topology: v5e:2x2
jax: 0.10.0
libtpu: 0.0.40
codegen_flags: <defaults>
</compile_context>

<pallas_src>
import jax
import jax.numpy as jnp
from jax import lax
from jax.experimental import pallas as pl
from jax.experimental.pallas import tpu as pltpu

LN_EPS = 1e-5  # nn.LayerNorm default


def _round_up(n, m):
    return ((n + m - 1) // m) * m


def _pad_dim(n):
    # Lane-dense padding only pays off for large feature dims; small or already
    # 128-aligned dims stay unpadded (a full-dim block is always legal).
    if n % 128 == 0 or n < 128:
        return n
    return _round_up(n, 128)


def _vmem_limit_bytes():
    try:
        cap = int(pltpu.get_tpu_info().vmem_capacity_bytes)
    except Exception:
        cap = 0
    if cap <= 0:
        cap = 64 * 1024 * 1024  # conservative: v7x per-TensorCore physical VMEM
    # 3/4 of physical: 48 MiB on v7x, 96 MiB on v5e/v6e.
    return max(32 * 1024 * 1024, (cap * 3) // 4)


def _choose_tf(F_pad, D_pad, w_itemsize, vmem_limit):
    """FFN-dim chunk. Single chunk when both weight matrices fit comfortably."""
    full = 2 * D_pad * F_pad * w_itemsize  # w1 + w2, single-buffered
    if full <= vmem_limit // 2:
        return F_pad
    budget = max(vmem_limit // 3, 4 << 20)
    tf = budget // (4 * D_pad * w_itemsize)  # 2 matrices x 2 pipeline buffers
    tf = max(128, (tf // 128) * 128)
    return int(min(tf, F_pad))


def _choose_tm(M, D_pad, tf, num_f, x_itemsize, w_itemsize, vmem_limit):
    """Token-tile rows: as big as the VMEM budget allows (amortizes grid-step cost)."""
    w_bufs = 1 if num_f == 1 else 2
    const_bytes = w_bufs * 2 * D_pad * tf * w_itemsize  # w1 + w2 (chunks)
    const_bytes += 8 * (D_pad + tf) * 4                 # biases / gamma / beta / mask
    budget = vmem_limit - const_bytes - (4 << 20)       # headroom
    per_row = (
        2 * 2 * D_pad * x_itemsize   # x-in and out tiles, double-buffered
        + tf * 4                     # f32 hidden chunk
        + 3 * D_pad * 4              # f32 accumulator scratch + residual temps
    )
    tm = budget // per_row if budget > per_row * 8 else 8
    tm = int(max(8, min((tm // 8) * 8, 1024)))
    tm = min(tm, _round_up(M, 8))
    # v7x megacore: ensure the parallel axis has >= 2 steps when M allows, so
    # both TensorCores get work (no-op on single-TC v5e/v6e).
    if pl.cdiv(M, tm) < 2 and M > 8:
        tm = max(8, _round_up(pl.cdiv(M, 2), 8))
    return tm


def make_ffn_kernel(d_true, use_mask):
    """Fused pointwise-conv1 -> ReLU -> pointwise-conv2 -> residual -> LayerNorm."""
    inv_d = 1.0 / float(d_true)

    def body(x_ref, w1_ref, b1_ref, w2_ref, b2_ref, gamma_ref, beta_ref, mask,
             o_ref, acc_ref):
        j = pl.program_id(1)

        @pl.when(j == 0)
        def _():
            acc_ref[...] = jnp.zeros_like(acc_ref)

        # x tile in its native dtype (no eager upcast); MXU accumulates in f32.
        x = x_ref[...]
        h = jnp.dot(x, w1_ref[...], preferred_element_type=jnp.float32)
        h = jnp.maximum(h + b1_ref[...].astype(jnp.float32), 0.0)
        acc_ref[...] += jnp.dot(h.astype(w2_ref.dtype), w2_ref[...],
                                preferred_element_type=jnp.float32)

        @pl.when(j == pl.num_programs(1) - 1)
        def _():
            y = acc_ref[...] + b2_ref[...].astype(jnp.float32)
            # dropout(p=0.0) is identity; residual add in f32.
            r = x.astype(jnp.float32) + y
            # LayerNorm over the TRUE model_dim. Padded lanes of r are exactly
            # zero (zero-padded x / weights / biases), so the mean is already
            # correct; the precomputed 0/1 mask removes the -mean contamination
            # on padded lanes before the variance (one vmul, no iota/select).
            mean = jnp.sum(r, axis=-1, keepdims=True) * inv_d
            cent = r - mean
            if mask is not None:
                cent = cent * mask
            var = jnp.sum(cent * cent, axis=-1, keepdims=True) * inv_d
            norm = cent * lax.rsqrt(var + LN_EPS)
            out = (norm * gamma_ref[...].astype(jnp.float32)
                   + beta_ref[...].astype(jnp.float32))
            o_ref[...] = out.astype(o_ref.dtype)

    if use_mask:
        def kernel(x_ref, w1_ref, b1_ref, w2_ref, b2_ref, gamma_ref, beta_ref,
                   mask_ref, o_ref, acc_ref):
            body(x_ref, w1_ref, b1_ref, w2_ref, b2_ref, gamma_ref, beta_ref,
                 mask_ref[...], o_ref, acc_ref)
    else:
        def kernel(x_ref, w1_ref, b1_ref, w2_ref, b2_ref, gamma_ref, beta_ref,
                   o_ref, acc_ref):
            body(x_ref, w1_ref, b1_ref, w2_ref, b2_ref, gamma_ref, beta_ref,
                 None, o_ref, acc_ref)

    return kernel


def ffn_forward(x, w1, b1, w2, b2, gamma, beta, *, tm=None):
    """x: (B, S, D). w1: (D, F), b1: (F,), w2: (F, D), b2: (D,), gamma/beta: (D,)."""
    B, S, D = x.shape
    F = w1.shape[1]
    M = B * S
    x_itemsize = jnp.dtype(x.dtype).itemsize
    w_itemsize = jnp.dtype(w1.dtype).itemsize

    vmem_limit = _vmem_limit_bytes()

    D_pad = _pad_dim(D)
    F_pad = _pad_dim(F)
    tf = _choose_tf(F_pad, D_pad, w_itemsize, vmem_limit)
    if tf < F_pad:
        F_pad = _round_up(F_pad, tf)  # chunks must tile F exactly (weight-side pad only)
    num_f = F_pad // tf

    if tm is None:
        tm = _choose_tm(M, D_pad, tf, num_f, x_itemsize, w_itemsize, vmem_limit)
    else:
        tm = max(8, min(_round_up(tm, 8), _round_up(M, 8)))
    grid_m = pl.cdiv(M, tm)

    # Activations: no M padding (the grid handles the ragged tail); pad D only
    # when a large, non-128-multiple model_dim makes lane-dense stores worth it.
    x2 = x.reshape(M, D)
    if D_pad != D:
        x2 = jnp.pad(x2, ((0, 0), (0, D_pad - D)))

    if (D_pad, F_pad) != (D, F):
        w1p = jnp.pad(w1, ((0, D_pad - D), (0, F_pad - F)))
        w2p = jnp.pad(w2, ((0, F_pad - F), (0, D_pad - D)))
        b1p = jnp.pad(b1, (0, F_pad - F))
        b2p = jnp.pad(b2, (0, D_pad - D))
        g = jnp.pad(gamma, (0, D_pad - D))
        be = jnp.pad(beta, (0, D_pad - D))
    else:
        w1p, w2p, b1p, b2p, g, be = w1, w2, b1, b2, gamma, beta
    b1p = b1p.reshape(1, F_pad)
    b2p = b2p.reshape(1, D_pad)
    g = g.reshape(1, D_pad)
    be = be.reshape(1, D_pad)

    use_mask = D_pad != D
    kernel = make_ffn_kernel(D, use_mask)

    cost = pl.CostEstimate(
        flops=4 * M * D_pad * F_pad,
        transcendentals=M,
        bytes_accessed=int(
            2 * M * D_pad * x_itemsize
            + 2 * D_pad * F_pad * w_itemsize
            + (2 * F_pad + 6 * D_pad) * w_itemsize
        ),
    )

    def run(single_buffer_consts):
        def const_spec(shape, index_map, constant):
            if constant and single_buffer_consts:
                return pl.BlockSpec(shape, index_map, pipeline_mode=pl.Buffered(1))
            return pl.BlockSpec(shape, index_map)

        weights_const = num_f == 1  # w1/b1/w2 are only grid-constant if F isn't chunked
        in_specs = [
            pl.BlockSpec((tm, D_pad), lambda i, j: (i, 0)),               # x tile
            const_spec((D_pad, tf), lambda i, j: (0, j), weights_const),  # w1 chunk
            const_spec((1, tf), lambda i, j: (0, j), weights_const),      # b1 chunk
            const_spec((tf, D_pad), lambda i, j: (j, 0), weights_const),  # w2 chunk
            const_spec((1, D_pad), lambda i, j: (0, 0), True),            # b2
            const_spec((1, D_pad), lambda i, j: (0, 0), True),            # gamma
            const_spec((1, D_pad), lambda i, j: (0, 0), True),            # beta
        ]
        args = [x2, w1p, b1p, w2p, b2p, g, be]
        if use_mask:
            in_specs.append(const_spec((1, D_pad), lambda i, j: (0, 0), True))
            args.append((jnp.arange(D_pad) < D).astype(jnp.float32).reshape(1, D_pad))

        return pl.pallas_call(
            kernel,
            out_shape=jax.ShapeDtypeStruct((M, D_pad), x.dtype),
            grid_spec=pltpu.PrefetchScalarGridSpec(
                num_scalar_prefetch=0,
                grid=(grid_m, num_f),  # reduction (F) axis last
                in_specs=in_specs,
                out_specs=pl.BlockSpec((tm, D_pad), lambda i, j: (i, 0)),
                scratch_shapes=[pltpu.VMEM((tm, D_pad), jnp.float32)],
            ),
            compiler_params=pltpu.CompilerParams(
                dimension_semantics=("parallel", "arbitrary"),
                vmem_limit_bytes=int(vmem_limit),
            ),
            cost_estimate=cost,
        )(*args)

    try:
        out = run(single_buffer_consts=True)
    except Exception:
        # TODO(synk): this Pallas build rejected pl.Buffered(1) single-buffering
        # of the grid-constant operands; fall back to default double buffering.
        out = run(single_buffer_consts=False)

    if D_pad != D:
        out = out[:, :D]
    return out.reshape(B, S, D)


def ffn_reference(x, w1, b1, w2, b2, gamma, beta):
    """Pure-JAX reference mirroring the PyTorch forward."""
    h = jnp.maximum(jnp.einsum("bsd,df->bsf", x, w1) + b1, 0.0)
    y = jnp.einsum("bsf,fd->bsd", h, w2) + b2
    r = x + y
    mean = jnp.mean(r, axis=-1, keepdims=True)
    var = jnp.mean((r - mean) ** 2, axis=-1, keepdims=True)
    return (r - mean) / jnp.sqrt(var + LN_EPS) * gamma + beta


if __name__ == "__main__":
    # Small shapes consistent with the module: batch=2, seq=8, model_dim=32, ffn_dim=64.
    B, S, D, F = 2, 8, 32, 64

    key = jax.random.PRNGKey(0)
    kx, k1, k2, k3, k4 = jax.random.split(key, 5)

    x = jax.random.normal(kx, (B, S, D), dtype=jnp.float32)

    # Conv1d weights are (out, in, 1) in PyTorch; stored pre-transposed as (in, out).
    w1 = jax.random.normal(k1, (D, F), dtype=jnp.float32) * 0.05
    b1 = jax.random.normal(k2, (F,), dtype=jnp.float32) * 0.05
    w2 = jax.random.normal(k3, (F, D), dtype=jnp.float32) * 0.05
    b2 = jax.random.normal(k4, (D,), dtype=jnp.float32) * 0.05
    gamma = jnp.ones((D,), dtype=jnp.float32)
    beta = jnp.zeros((D,), dtype=jnp.float32)

    out = ffn_forward(x, w1, b1, w2, b2, gamma, beta)
    out = jax.block_until_ready(out)

    ref = ffn_reference(x, w1, b1, w2, b2, gamma, beta)
    assert out.shape == (B, S, D)
    assert jnp.allclose(out, ref, atol=1e-4, rtol=1e-4), "mismatch vs reference"

    print("KERNEL_OK")
</pallas_src>

<mosaic_0001>
module attributes {stable_mosaic.version = 11 : i64} {
  func.func @kernel(%arg0: i32, %arg1: i32, %arg2: memref<8x32xf32, #tpu.memory_space<vmem>>, %arg3: memref<32x64xf32, #tpu.memory_space<vmem>>, %arg4: memref<1x64xf32, #tpu.memory_space<vmem>>, %arg5: memref<64x32xf32, #tpu.memory_space<vmem>>, %arg6: memref<1x32xf32, #tpu.memory_space<vmem>>, %arg7: memref<1x32xf32, #tpu.memory_space<vmem>>, %arg8: memref<1x32xf32, #tpu.memory_space<vmem>>, %arg9: memref<8x32xf32, #tpu.memory_space<vmem>>, %arg10: memref<8x32xf32, #tpu.memory_space<vmem>>) attributes {dimension_semantics = [#tpu.dimension_semantics<parallel>, #tpu.dimension_semantics<arbitrary>], iteration_bounds = array<i64: 2, 1>, scalar_prefetch = 0 : i64, scratch_operands = 1 : i64, tpu.core_type = #tpu.core_type<tc>, window_params = [{transform_indices = @transform_0, window_bounds = array<i64: 8, 32>}, {pipeline_mode = #tpu.pipeline_mode<synchronous>, transform_indices = @transform_1, window_bounds = array<i64: 32, 64>}, {pipeline_mode = #tpu.pipeline_mode<synchronous>, transform_indices = @transform_2, window_bounds = array<i64: 1, 64>}, {pipeline_mode = #tpu.pipeline_mode<synchronous>, transform_indices = @transform_3, window_bounds = array<i64: 64, 32>}, {pipeline_mode = #tpu.pipeline_mode<synchronous>, transform_indices = @transform_4, window_bounds = array<i64: 1, 32>}, {pipeline_mode = #tpu.pipeline_mode<synchronous>, transform_indices = @transform_5, window_bounds = array<i64: 1, 32>}, {pipeline_mode = #tpu.pipeline_mode<synchronous>, transform_indices = @transform_6, window_bounds = array<i64: 1, 32>}, {transform_indices = @transform_7, window_bounds = array<i64: 8, 32>}]} {
    %c0_i32 = arith.constant 0 : i32
    %0 = arith.cmpi eq, %arg1, %c0_i32 : i32
    %1 = arith.extui %0 : i1 to i32
    %c0_i32_0 = arith.constant 0 : i32
    %2 = arith.cmpi ne, %1, %c0_i32_0 : i32
    scf.if %2 {
      %cst_16 = arith.constant 0.000000e+00 : f32
      %19 = vector.broadcast %cst_16 : f32 to vector<8x32xf32>
      %c0_17 = arith.constant 0 : index
      %c0_18 = arith.constant 0 : index
      %20 = vector.load %arg10[%c0_17, %c0_18] : memref<8x32xf32, #tpu.memory_space<vmem>>, vector<8x32xf32>
      tpu.vector_store %arg10[%c0_17, %c0_18], %19 {strides = array<i32>} : memref<8x32xf32, #tpu.memory_space<vmem>>, vector<8x32xf32>,
    } else {
    }
    %c0 = arith.constant 0 : index
    %c0_1 = arith.constant 0 : index
    %3 = vector.load %arg2[%c0, %c0_1] : memref<8x32xf32, #tpu.memory_space<vmem>>, vector<8x32xf32>
    %c0_2 = arith.constant 0 : index
    %c0_3 = arith.constant 0 : index
    %4 = vector.load %arg3[%c0_2, %c0_3] : memref<32x64xf32, #tpu.memory_space<vmem>>, vector<32x64xf32>
    %cst = arith.constant dense<0.000000e+00> : vector<8x64xf32>
    %5 = tpu.matmul %3, %4, %cst {dimension_numbers = #tpu.dot_dimension_numbers<[1], [0], [0], [1], [0, 0, 1, 1], [], []>} : vector<8x32xf32>, vector<32x64xf32>, vector<8x64xf32> -> vector<8x64xf32>
    %c0_4 = arith.constant 0 : index
    %c0_5 = arith.constant 0 : index
    %6 = vector.load %arg4[%c0_4, %c0_5] : memref<1x64xf32, #tpu.memory_space<vmem>>, vector<1x64xf32>
    %7 = vector.broadcast %6 : vector<1x64xf32> to vector<8x64xf32>
    %8 = arith.addf %5, %7 : vector<8x64xf32>
    %cst_6 = arith.constant 0.000000e+00 : f32
    %9 = vector.broadcast %cst_6 : f32 to vector<8x64xf32>
    %10 = arith.maximumf %8, %9 : vector<8x64xf32>
    %c0_7 = arith.constant 0 : index
    %c0_8 = arith.constant 0 : index
    %11 = vector.load %arg10[%c0_7, %c0_8] : memref<8x32xf32, #tpu.memory_space<vmem>>, vector<8x32xf32>
    %c0_9 = arith.constant 0 : index
    %c0_10 = arith.constant 0 : index
    %12 = vector.load %arg5[%c0_9, %c0_10] : memref<64x32xf32, #tpu.memory_space<vmem>>, vector<64x32xf32>
    %cst_11 = arith.constant dense<0.000000e+00> : vector<8x32xf32>
    %13 = tpu.matmul %10, %12, %cst_11 {dimension_numbers = #tpu.dot_dimension_numbers<[1], [0], [0], [1], [0, 0, 1, 1], [], []>} : vector<8x64xf32>, vector<64x32xf32>, vector<8x32xf32> -> vector<8x32xf32>
    %14 = arith.addf %11, %13 : vector<8x32xf32>
    %c0_12 = arith.constant 0 : index
    %c0_13 = arith.constant 0 : index
    %15 = vector.load %arg10[%c0_12, %c0_13] : memref<8x32xf32, #tpu.memory_space<vmem>>, vector<8x32xf32>
    tpu.vector_store %arg10[%c0_12, %c0_13], %14 {strides = array<i32>} : memref<8x32xf32, #tpu.memory_space<vmem>>, vector<8x32xf32>,
    %c0_i32_14 = arith.constant 0 : i32
    %16 = arith.cmpi eq, %arg1, %c0_i32_14 : i32
    %17 = arith.extui %16 : i1 to i32
    %c0_i32_15 = arith.constant 0 : i32
    %18 = arith.cmpi ne, %17, %c0_i32_15 : i32
    scf.if %18 {
      %c0_16 = arith.constant 0 : index
      %c0_17 = arith.constant 0 : index
      %19 = vector.load %arg10[%c0_16, %c0_17] : memref<8x32xf32, #tpu.memory_space<vmem>>, vector<8x32xf32>
      %c0_18 = arith.constant 0 : index
      %c0_19 = arith.constant 0 : index
      %20 = vector.load %arg6[%c0_18, %c0_19] : memref<1x32xf32, #tpu.memory_space<vmem>>, vector<1x32xf32>
      %21 = vector.broadcast %20 : vector<1x32xf32> to vector<8x32xf32>
      %22 = arith.addf %19, %21 : vector<8x32xf32>
      %23 = arith.addf %3, %22 : vector<8x32xf32>
      %cst_20 = arith.constant dense<0.000000e+00> : vector<8xf32>
      %24 = vector.multi_reduction <add>, %23, %cst_20 [1] : vector<8x32xf32> to vector<8xf32>
      %25 = vector.shape_cast %24 : vector<8xf32> to vector<8x1xf32>
      %cst_21 = arith.constant 3.125000e-02 : f32
      %26 = vector.broadcast %cst_21 : f32 to vector<8x1xf32>
      %27 = arith.mulf %25, %26 : vector<8x1xf32>
      %28 = vector.broadcast %27 : vector<8x1xf32> to vector<8x32xf32>
      %29 = arith.subf %23, %28 : vector<8x32xf32>
      %30 = arith.mulf %29, %29 : vector<8x32xf32>
      %cst_22 = arith.constant dense<0.000000e+00> : vector<8xf32>
      %31 = vector.multi_reduction <add>, %30, %cst_22 [1] : vector<8x32xf32> to vector<8xf32>
      %32 = vector.shape_cast %31 : vector<8xf32> to vector<8x1xf32>
      %cst_23 = arith.constant 3.125000e-02 : f32
      %33 = vector.broadcast %cst_23 : f32 to vector<8x1xf32>
      %34 = arith.mulf %32, %33 : vector<8x1xf32>
      %cst_24 = arith.constant 9.99999974E-6 : f32
      %35 = vector.broadcast %cst_24 : f32 to vector<8x1xf32>
      %36 = arith.addf %34, %35 : vector<8x1xf32>
      %37 = math.rsqrt %36 : vector<8x1xf32>
      %38 = vector.broadcast %37 : vector<8x1xf32> to vector<8x32xf32>
      %39 = arith.mulf %29, %38 : vector<8x32xf32>
      %c0_25 = arith.constant 0 : index
      %c0_26 = arith.constant 0 : index
      %40 = vector.load %arg7[%c0_25, %c0_26] : memref<1x32xf32, #tpu.memory_space<vmem>>, vector<1x32xf32>
      %41 = vector.broadcast %40 : vector<1x32xf32> to vector<8x32xf32>
      %42 = arith.mulf %39, %41 : vector<8x32xf32>
      %c0_27 = arith.constant 0 : index
      %c0_28 = arith.constant 0 : index
      %43 = vector.load %arg8[%c0_27, %c0_28] : memref<1x32xf32, #tpu.memory_space<vmem>>, vector<1x32xf32>
      %44 = vector.broadcast %43 : vector<1x32xf32> to vector<8x32xf32>
      %45 = arith.addf %42, %44 : vector<8x32xf32>
      %c0_29 = arith.constant 0 : index
      %c0_30 = arith.constant 0 : index
      %46 = vector.load %arg9[%c0_29, %c0_30] : memref<8x32xf32, #tpu.memory_space<vmem>>, vector<8x32xf32>
      tpu.vector_store %arg9[%c0_29, %c0_30], %45 {strides = array<i32>} : memref<8x32xf32, #tpu.memory_space<vmem>>, vector<8x32xf32>,
    } else {
    }
    return
  }
  func.func @transform_0(%arg0: i32, %arg1: i32) -> (i32, i32) {
    %c0_i32 = arith.constant 0 : i32
    %c0_i32_0 = arith.constant 0 : i32
    return %arg0, %c0_i32 : i32, i32
  }
  func.func @transform_1(%arg0: i32, %arg1: i32) -> (i32, i32) {
    %c0_i32 = arith.constant 0 : i32
    %c0_i32_0 = arith.constant 0 : i32
    return %c0_i32, %arg1 : i32, i32
  }
  func.func @transform_2(%arg0: i32, %arg1: i32) -> (i32, i32) {
    %c0_i32 = arith.constant 0 : i32
    %c0_i32_0 = arith.constant 0 : i32
    return %c0_i32, %arg1 : i32, i32
  }
  func.func @transform_3(%arg0: i32, %arg1: i32) -> (i32, i32) {
    %c0_i32 = arith.constant 0 : i32
    %c0_i32_0 = arith.constant 0 : i32
    return %arg1, %c0_i32 : i32, i32
  }
  func.func @transform_4(%arg0: i32, %arg1: i32) -> (i32, i32) {
    %c0_i32 = arith.constant 0 : i32
    %c0_i32_0 = arith.constant 0 : i32
    %c0_i32_1 = arith.constant 0 : i32
    return %c0_i32, %c0_i32_0 : i32, i32
  }
  func.func @transform_5(%arg0: i32, %arg1: i32) -> (i32, i32) {
    %c0_i32 = arith.constant 0 : i32
    %c0_i32_0 = arith.constant 0 : i32
    %c0_i32_1 = arith.constant 0 : i32
    return %c0_i32, %c0_i32_0 : i32, i32
  }
  func.func @transform_6(%arg0: i32, %arg1: i32) -> (i32, i32) {
    %c0_i32 = arith.constant 0 : i32
    %c0_i32_0 = arith.constant 0 : i32
    %c0_i32_1 = arith.constant 0 : i32
    return %c0_i32, %c0_i32_0 : i32, i32
  }
  func.func @transform_7(%arg0: i32, %arg1: i32) -> (i32, i32) {
    %c0_i32 = arith.constant 0 : i32
    %c0_i32_0 = arith.constant 0 : i32
    return %arg0, %c0_i32 : i32, i32
  }
}

module attributes {stable_mosaic.version = 11 : i64} {
  func.func @kernel(%arg0: i32, %arg1: i32, %arg2: memref<8x32xf32, #tpu.memory_space<vmem>>, %arg3: memref<32x64xf32, #tpu.memory_space<vmem>>, %arg4: memref<1x64xf32, #tpu.memory_space<vmem>>, %arg5: memref<64x32xf32, #tpu.memory_space<vmem>>, %arg6: memref<1x32xf32, #tpu.memory_space<vmem>>, %arg7: memref<1x32xf32, #tpu.memory_space<vmem>>, %arg8: memref<1x32xf32, #tpu.memory_space<vmem>>, %arg9: memref<8x32xf32, #tpu.memory_space<vmem>>, %arg10: memref<8x32xf32, #tpu.memory_space<vmem>>) attributes {dimension_semantics = [#tpu.dimension_semantics<parallel>, #tpu.dimension_semantics<arbitrary>], iteration_bounds = array<i64: 2, 1>, scalar_prefetch = 0 : i64, scratch_operands = 1 : i64, tpu.core_type = #tpu.core_type<tc>, window_params = [{transform_indices = @transform_0, window_bounds = array<i64: 8, 32>}, {transform_indices = @transform_1, window_bounds = array<i64: 32, 64>}, {transform_indices = @transform_2, window_bounds = array<i64: 1, 64>}, {transform_indices = @transform_3, window_bounds = array<i64: 64, 32>}, {pipeline_mode = #tpu.pipeline_mode<synchronous>, transform_indices = @transform_4, window_bounds = array<i64: 1, 32>}, {pipeline_mode = #tpu.pipeline_mode<synchronous>, transform_indices = @transform_5, window_bounds = array<i64: 1, 32>}, {pipeline_mode = #tpu.pipeline_mode<synchronous>, transform_indices = @transform_6, window_bounds = array<i64: 1, 32>}, {transform_indices = @transform_7, window_bounds = array<i64: 8, 32>}]} {
    %c0_i32 = arith.constant 0 : i32
    %0 = arith.cmpi eq, %arg1, %c0_i32 : i32
    %1 = arith.extui %0 : i1 to i32
    %c0_i32_0 = arith.constant 0 : i32
    %2 = arith.cmpi ne, %1, %c0_i32_0 : i32
    scf.if %2 {
      %cst_16 = arith.constant 0.000000e+00 : f32
      %19 = vector.broadcast %cst_16 : f32 to vector<8x32xf32>
      %c0_17 = arith.constant 0 : index
      %c0_18 = arith.constant 0 : index
      %20 = vector.load %arg10[%c0_17, %c0_18] : memref<8x32xf32, #tpu.memory_space<vmem>>, vector<8x32xf32>
      tpu.vector_store %arg10[%c0_17, %c0_18], %19 {strides = array<i32>} : memref<8x32xf32, #tpu.memory_space<vmem>>, vector<8x32xf32>,
    } else {
    }
    %c0 = arith.constant 0 : index
    %c0_1 = arith.constant 0 : index
    %3 = vector.load %arg2[%c0, %c0_1] : memref<8x32xf32, #tpu.memory_space<vmem>>, vector<8x32xf32>
    %c0_2 = arith.constant 0 : index
    %c0_3 = arith.constant 0 : index
    %4 = vector.load %arg3[%c0_2, %c0_3] : memref<32x64xf32, #tpu.memory_space<vmem>>, vector<32x64xf32>
    %cst = arith.constant dense<0.000000e+00> : vector<8x64xf32>
    %5 = tpu.matmul %3, %4, %cst {dimension_numbers = #tpu.dot_dimension_numbers<[1], [0], [0], [1], [0, 0, 1, 1], [], []>} : vector<8x32xf32>, vector<32x64xf32>, vector<8x64xf32> -> vector<8x64xf32>
    %c0_4 = arith.constant 0 : index
    %c0_5 = arith.constant 0 : index
    %6 = vector.load %arg4[%c0_4, %c0_5] : memref<1x64xf32, #tpu.memory_space<vmem>>, vector<1x64xf32>
    %7 = vector.broadcast %6 : vector<1x64xf32> to vector<8x64xf32>
    %8 = arith.addf %5, %7 : vector<8x64xf32>
    %cst_6 = arith.constant 0.000000e+00 : f32
    %9 = vector.broadcast %cst_6 : f32 to vector<8x64xf32>
    %10 = arith.maximumf %8, %9 : vector<8x64xf32>
    %c0_7 = arith.constant 0 : index
    %c0_8 = arith.constant 0 : index
    %11 = vector.load %arg10[%c0_7, %c0_8] : memref<8x32xf32, #tpu.memory_space<vmem>>, vector<8x32xf32>
    %c0_9 = arith.constant 0 : index
    %c0_10 = arith.constant 0 : index
    %12 = vector.load %arg5[%c0_9, %c0_10] : memref<64x32xf32, #tpu.memory_space<vmem>>, vector<64x32xf32>
    %cst_11 = arith.constant dense<0.000000e+00> : vector<8x32xf32>
    %13 = tpu.matmul %10, %12, %cst_11 {dimension_numbers = #tpu.dot_dimension_numbers<[1], [0], [0], [1], [0, 0, 1, 1], [], []>} : vector<8x64xf32>, vector<64x32xf32>, vector<8x32xf32> -> vector<8x32xf32>
    %14 = arith.addf %11, %13 : vector<8x32xf32>
    %c0_12 = arith.constant 0 : index
    %c0_13 = arith.constant 0 : index
    %15 = vector.load %arg10[%c0_12, %c0_13] : memref<8x32xf32, #tpu.memory_space<vmem>>, vector<8x32xf32>
    tpu.vector_store %arg10[%c0_12, %c0_13], %14 {strides = array<i32>} : memref<8x32xf32, #tpu.memory_space<vmem>>, vector<8x32xf32>,
    %c0_i32_14 = arith.constant 0 : i32
    %16 = arith.cmpi eq, %arg1, %c0_i32_14 : i32
    %17 = arith.extui %16 : i1 to i32
    %c0_i32_15 = arith.constant 0 : i32
    %18 = arith.cmpi ne, %17, %c0_i32_15 : i32
    scf.if %18 {
      %c0_16 = arith.constant 0 : index
      %c0_17 = arith.constant 0 : index
      %19 = vector.load %arg10[%c0_16, %c0_17] : memref<8x32xf32, #tpu.memory_space<vmem>>, vector<8x32xf32>
      %c0_18 = arith.constant 0 : index
      %c0_19 = arith.constant 0 : index
      %20 = vector.load %arg6[%c0_18, %c0_19] : memref<1x32xf32, #tpu.memory_space<vmem>>, vector<1x32xf32>
      %21 = vector.broadcast %20 : vector<1x32xf32> to vector<8x32xf32>
      %22 = arith.addf %19, %21 : vector<8x32xf32>
      %23 = arith.addf %3, %22 : vector<8x32xf32>
      %cst_20 = arith.constant dense<0.000000e+00> : vector<8xf32>
      %24 = vector.multi_reduction <add>, %23, %cst_20 [1] : vector<8x32xf32> to vector<8xf32>
      %25 = vector.shape_cast %24 : vector<8xf32> to vector<8x1xf32>
      %cst_21 = arith.constant 3.125000e-02 : f32
      %26 = vector.broadcast %cst_21 : f32 to vector<8x1xf32>
      %27 = arith.mulf %25, %26 : vector<8x1xf32>
      %28 = vector.broadcast %27 : vector<8x1xf32> to vector<8x32xf32>
      %29 = arith.subf %23, %28 : vector<8x32xf32>
      %30 = arith.mulf %29, %29 : vector<8x32xf32>
      %cst_22 = arith.constant dense<0.000000e+00> : vector<8xf32>
      %31 = vector.multi_reduction <add>, %30, %cst_22 [1] : vector<8x32xf32> to vector<8xf32>
      %32 = vector.shape_cast %31 : vector<8xf32> to vector<8x1xf32>
      %cst_23 = arith.constant 3.125000e-02 : f32
      %33 = vector.broadcast %cst_23 : f32 to vector<8x1xf32>
      %34 = arith.mulf %32, %33 : vector<8x1xf32>
      %cst_24 = arith.constant 9.99999974E-6 : f32
      %35 = vector.broadcast %cst_24 : f32 to vector<8x1xf32>
      %36 = arith.addf %34, %35 : vector<8x1xf32>
      %37 = math.rsqrt %36 : vector<8x1xf32>
      %38 = vector.broadcast %37 : vector<8x1xf32> to vector<8x32xf32>
      %39 = arith.mulf %29, %38 : vector<8x32xf32>
      %c0_25 = arith.constant 0 : index
      %c0_26 = arith.constant 0 : index
      %40 = vector.load %arg7[%c0_25, %c0_26] : memref<1x32xf32, #tpu.memory_space<vmem>>, vector<1x32xf32>
      %41 = vector.broadcast %40 : vector<1x32xf32> to vector<8x32xf32>
      %42 = arith.mulf %39, %41 : vector<8x32xf32>
      %c0_27 = arith.constant 0 : index
      %c0_28 = arith.constant 0 : index
      %43 = vector.load %arg8[%c0_27, %c0_28] : memref<1x32xf32, #tpu.memory_space<vmem>>, vector<1x32xf32>
      %44 = vector.broadcast %43 : vector<1x32xf32> to vector<8x32xf32>
      %45 = arith.addf %42, %44 : vector<8x32xf32>
      %c0_29 = arith.constant 0 : index
      %c0_30 = arith.constant 0 : index
      %46 = vector.load %arg9[%c0_29, %c0_30] : memref<8x32xf32, #tpu.memory_space<vmem>>, vector<8x32xf32>
      tpu.vector_store %arg9[%c0_29, %c0_30], %45 {strides = array<i32>} : memref<8x32xf32, #tpu.memory_space<vmem>>, vector<8x32xf32>,
    } else {
    }
    return
  }
  func.func @transform_0(%arg0: i32, %arg1: i32) -> (i32, i32) {
    %c0_i32 = arith.constant 0 : i32
    %c0_i32_0 = arith.constant 0 : i32
    return %arg0, %c0_i32 : i32, i32
  }
  func.func @transform_1(%arg0: i32, %arg1: i32) -> (i32, i32) {
    %c0_i32 = arith.constant 0 : i32
    %c0_i32_0 = arith.constant 0 : i32
    return %c0_i32, %arg1 : i32, i32
  }
  func.func @transform_2(%arg0: i32, %arg1: i32) -> (i32, i32) {
    %c0_i32 = arith.constant 0 : i32
    %c0_i32_0 = arith.constant 0 : i32
    return %c0_i32, %arg1 : i32, i32
  }
  func.func @transform_3(%arg0: i32, %arg1: i32) -> (i32, i32) {
    %c0_i32 = arith.constant 0 : i32
    %c0_i32_0 = arith.constant 0 : i32
    return %arg1, %c0_i32 : i32, i32
  }
  func.func @transform_4(%arg0: i32, %arg1: i32) -> (i32, i32) {
    %c0_i32 = arith.constant 0 : i32
    %c0_i32_0 = arith.constant 0 : i32
    %c0_i32_1 = arith.constant 0 : i32
    return %c0_i32, %c0_i32_0 : i32, i32
  }
  func.func @transform_5(%arg0: i32, %arg1: i32) -> (i32, i32) {
    %c0_i32 = arith.constant 0 : i32
    %c0_i32_0 = arith.constant 0 : i32
    %c0_i32_1 = arith.constant 0 : i32
    return %c0_i32, %c0_i32_0 : i32, i32
  }
  func.func @transform_6(%arg0: i32, %arg1: i32) -> (i32, i32) {
    %c0_i32 = arith.constant 0 : i32
    %c0_i32_0 = arith.constant 0 : i32
    %c0_i32_1 = arith.constant 0 : i32
    return %c0_i32, %c0_i32_0 : i32, i32
  }
  func.func @transform_7(%arg0: i32, %arg1: i32) -> (i32, i32) {
    %c0_i32 = arith.constant 0 : i32
    %c0_i32_0 = arith.constant 0 : i32
    return %arg0, %c0_i32 : i32, i32
  }
}

</mosaic_0001>

<llo_original>
// kernel: tpu_custom_call.1
$region0: #{tpu_custom_call.1}
  #allocation0 [shape = 'u32[]', space=smem, size = 0x4, offset = 0x4, fixed_abs, tag = 'smem constant byte address 0x4 - core index']
  #allocation1 [shape = 'u32[72,128]{1,0:T(1,128)}', space=vmem, size = 0x9000, scoped, tag = 'internal scratch']
  #allocation2 [shape = 'f32[8,32]{1,0:T(8,128)}', space=vmem, size = 0x1000, scoped, tag = 'scratch operand']
  %s0 = inlined_call_operand.vmem [shape: f32[16,32], index: 0, kind: input, shape index: {}]
  %s1 = inlined_call_operand.vmem [shape: f32[32,64], index: 1, kind: input, shape index: {}]
  %s2 = inlined_call_operand.vmem [shape: f32[1,64], index: 2, kind: input, shape index: {}]
  %s3 = inlined_call_operand.vmem [shape: f32[64,32], index: 3, kind: input, shape index: {}]
  %s4 = inlined_call_operand.vmem [shape: f32[1,32], index: 4, kind: input, shape index: {}]
  %s5 = inlined_call_operand.vmem [shape: f32[1,32], index: 5, kind: input, shape index: {}]
  %s6 = inlined_call_operand.vmem [shape: f32[1,32], index: 6, kind: input, shape index: {}]
  %s7 = inlined_call_operand.hbm [shape: f32[16,32], index: 7, kind: output, shape index: {}]
  %s8 = sld [smem:[#allocation0]]
  $region69: #{tpu_custom_call.1} parent=0
    _
  %s10 = ssub.s32 1, %s8
  %s11 = scalar_select 0, %s10, %s8
  $region1: #{tpu_custom_call.1} parent=0
    #allocation3 [shape = 'u8[8192]{0}', space=vmem, size = 0x2000, scoped, tag = 'output window, operand 0']
    #allocation4 [shape = 's32[2]{0}', space=sflag, size = 0x8, scoped, tag = 'scoped memory for tpu_custom_call.1']
    %12 = vsyncpa [#allocation4], 0
    %s13 = scalar_lea.sflag [#allocation4], 1
    %14 = vsyncpa %s13, 0
    loop: start=0, step=1, limit=4
    $region2: #{tpu_custom_call.1} parent=1 // loop_pre_header
      _
    $region3: #{tpu_custom_call.1} parent=1 // loop_header
      %s16 = sphi 0, %s20
      %p17 = scmp.ge.s32.totalorder %s16, 4
      %s23 = sphi 0, %s35
      %s24 = sphi 0, %s31
      %s25 = sphi 0, %s23
      %s26 = sphi 0, %s24
      %s27 = sphi 0, %s25
      %s28 = sphi 0, %s26
      %s38 = sphi 0, %s40
      %s41 = sphi 0, %s38
      %s42 = sphi 0, %s41
      %s58 = sphi 0, %s42
      %s64 = sphi 0, %s66
      %s67 = sphi 0, %s64
      %s68 = sphi 0, %s67
      %s84 = sphi 0, %s68
      %s90 = sphi 0, %s92
      %s93 = sphi 0, %s90
      %s94 = sphi 0, %s93
      %s110 = sphi 0, %s94
      %s116 = sphi 0, %s118
      %s119 = sphi 0, %s116
      %s120 = sphi 0, %s119
      %s136 = sphi 0, %s120
      %s140 = sphi 0, %s140
      %s142 = sphi 0, %s140
      %s143 = sphi 0, %s142
      %s157 = sphi 0, %s143
      %s161 = sphi 0, %s161
      %s163 = sphi 0, %s161
      %s164 = sphi 0, %s163
      %s178 = sphi 0, %s164
      %s182 = sphi 0, %s182
      %s184 = sphi 0, %s182
      %s185 = sphi 0, %s184
      %s199 = sphi 0, %s185
      %s205 = sphi 0, %s207
      %s208 = sphi 0, %s205
      %s209 = sphi 0, %s208
      %s225 = sphi 0, %s209
    $region4: #{tpu_custom_call.1} parent=1 // loop_header_branch
      %19 = sbr.rel (%p17) target = $region8
    $region5: #{tpu_custom_call.1} parent=1 // loop_body
      %s21 = ssub.s32 %s16, 1
      %s22 = ssub.s32 %s16, 2
      %s29 = sadd.s32 1, %s24
      %p30 = scmp.ge.s32.totalorder %s29, 1
      %s31 = scalar_select %p30, 0, %s29
      %s32 = sadd.s32 1, %s23
      %s33 = scalar_select %p30, %s32, %s23
      %p34 = scmp.ge.s32.totalorder %s33, 2
      %s35 = scalar_select %p34, 0, %s33
      %s36 = ssub.s32 %s23, %s35
      %p37 = scmp.eq.s32.totalorder %s36, 0
      %s39 = sadd.s32 %s38, 1
      %s40 = scalar_select %p37, %s38, %s39
      %p43 = pneg %p37
      %p44 = scmp.eq.s32.totalorder %s16, 1
      %p45 = por %p43, %p44
      %p46 = scmp.ne.s32.totalorder %s38, %s41
      %p47 = scmp.eq.s32.totalorder %s16, 0
      %p48 = por %p46, %p47
      %p49 = scmp.ne.s32.totalorder %s38, %s41
      %p50 = scmp.eq.s32.totalorder %s21, 1
      %p51 = por %p49, %p50
      %p52 = scmp.ne.s32.totalorder %s41, %s42
      %p53 = scmp.eq.s32.totalorder %s21, 0
      %p54 = por %p52, %p53
      %p55 = scmp.ne.s32.totalorder %s41, %s42
      %p56 = scmp.eq.s32.totalorder %s22, 1
      %p57 = por %p55, %p56
      %p59 = scmp.ne.s32.totalorder %s42, %s58
      %p60 = scmp.eq.s32.totalorder %s22, 0
      %p61 = por %p59, %p60
      %s62 = ssub.s32 %s24, %s31
      %p63 = scmp.eq.s32.totalorder %s62, 0
      %s65 = sadd.s32 %s64, 1
      %s66 = scalar_select %p63, %s64, %s65
      %p69 = pneg %p63
      %p70 = scmp.eq.s32.totalorder %s16, 1
      %p71 = por %p69, %p70
      %p72 = scmp.ne.s32.totalorder %s64, %s67
      %p73 = scmp.eq.s32.totalorder %s16, 0
      %p74 = por %p72, %p73
      %p75 = scmp.ne.s32.totalorder %s64, %s67
      %p76 = scmp.eq.s32.totalorder %s21, 1
      %p77 = por %p75, %p76
      %p78 = scmp.ne.s32.totalorder %s67, %s68
      %p79 = scmp.eq.s32.totalorder %s21, 0
      %p80 = por %p78, %p79
      %p81 = scmp.ne.s32.totalorder %s67, %s68
      %p82 = scmp.eq.s32.totalorder %s22, 1
      %p83 = por %p81, %p82
      %p85 = scmp.ne.s32.totalorder %s68, %s84
      %p86 = scmp.eq.s32.totalorder %s22, 0
      %p87 = por %p85, %p86
      %s88 = ssub.s32 %s24, %s31
      %p89 = scmp.eq.s32.totalorder %s88, 0
      %s91 = sadd.s32 %s90, 1
      %s92 = scalar_select %p89, %s90, %s91
      %p95 = pneg %p89
      %p96 = scmp.eq.s32.totalorder %s16, 1
      %p97 = por %p95, %p96
      %p98 = scmp.ne.s32.totalorder %s90, %s93
      %p99 = scmp.eq.s32.totalorder %s16, 0
      %p100 = por %p98, %p99
      %p101 = scmp.ne.s32.totalorder %s90, %s93
      %p102 = scmp.eq.s32.totalorder %s21, 1
      %p103 = por %p101, %p102
      %p104 = scmp.ne.s32.totalorder %s93, %s94
      %p105 = scmp.eq.s32.totalorder %s21, 0
      %p106 = por %p104, %p105
      %p107 = scmp.ne.s32.totalorder %s93, %s94
      %p108 = scmp.eq.s32.totalorder %s22, 1
      %p109 = por %p107, %p108
      %p111 = scmp.ne.s32.totalorder %s94, %s110
      %p112 = scmp.eq.s32.totalorder %s22, 0
      %p113 = por %p111, %p112
      %s114 = ssub.s32 %s24, %s31
      %p115 = scmp.eq.s32.totalorder %s114, 0
      %s117 = sadd.s32 %s116, 1
      %s118 = scalar_select %p115, %s116, %s117
      %p121 = pneg %p115
      %p122 = scmp.eq.s32.totalorder %s16, 1
      %p123 = por %p121, %p122
      %p124 = scmp.ne.s32.totalorder %s116, %s119
      %p125 = scmp.eq.s32.totalorder %s16, 0
      %p126 = por %p124, %p125
      %p127 = scmp.ne.s32.totalorder %s116, %s119
      %p128 = scmp.eq.s32.totalorder %s21, 1
      %p129 = por %p127, %p128
      %p130 = scmp.ne.s32.totalorder %s119, %s120
      %p131 = scmp.eq.s32.totalorder %s21, 0
      %p132 = por %p130, %p131
      %p133 = scmp.ne.s32.totalorder %s119, %s120
      %p134 = scmp.eq.s32.totalorder %s22, 1
      %p135 = por %p133, %p134
      %p137 = scmp.ne.s32.totalorder %s120, %s136
      %p138 = scmp.eq.s32.totalorder %s22, 0
      %p139 = por %p137, %p138
      %s141 = sadd.s32 %s140, 1
      %p144 = scmp.eq.s32.totalorder %s16, 1
      %p145 = scmp.ne.s32.totalorder %s140, %s142
      %p146 = scmp.eq.s32.totalorder %s16, 0
      %p147 = por %p145, %p146
      %p148 = scmp.ne.s32.totalorder %s140, %s142
      %p149 = scmp.eq.s32.totalorder %s21, 1
      %p150 = por %p148, %p149
      %p151 = scmp.ne.s32.totalorder %s142, %s143
      %p152 = scmp.eq.s32.totalorder %s21, 0
      %p153 = por %p151, %p152
      %p154 = scmp.ne.s32.totalorder %s142, %s143
      %p155 = scmp.eq.s32.totalorder %s22, 1
      %p156 = por %p154, %p155
      %p158 = scmp.ne.s32.totalorder %s143, %s157
      %p159 = scmp.eq.s32.totalorder %s22, 0
      %p160 = por %p158, %p159
      %s162 = sadd.s32 %s161, 1
      %p165 = scmp.eq.s32.totalorder %s16, 1
      %p166 = scmp.ne.s32.totalorder %s161, %s163
      %p167 = scmp.eq.s32.totalorder %s16, 0
      %p168 = por %p166, %p167
      %p169 = scmp.ne.s32.totalorder %s161, %s163
      %p170 = scmp.eq.s32.totalorder %s21, 1
      %p171 = por %p169, %p170
      %p172 = scmp.ne.s32.totalorder %s163, %s164
      %p173 = scmp.eq.s32.totalorder %s21, 0
      %p174 = por %p172, %p173
      %p175 = scmp.ne.s32.totalorder %s163, %s164
      %p176 = scmp.eq.s32.totalorder %s22, 1
      %p177 = por %p175, %p176
      %p179 = scmp.ne.s32.totalorder %s164, %s178
      %p180 = scmp.eq.s32.totalorder %s22, 0
      %p181 = por %p179, %p180
      %s183 = sadd.s32 %s182, 1
      %p186 = scmp.eq.s32.totalorder %s16, 1
      %p187 = scmp.ne.s32.totalorder %s182, %s184
      %p188 = scmp.eq.s32.totalorder %s16, 0
      %p189 = por %p187, %p188
      %p190 = scmp.ne.s32.totalorder %s182, %s184
      %p191 = scmp.eq.s32.totalorder %s21, 1
      %p192 = por %p190, %p191
      %p193 = scmp.ne.s32.totalorder %s184, %s185
      %p194 = scmp.eq.s32.totalorder %s21, 0
      %p195 = por %p193, %p194
      %p196 = scmp.ne.s32.totalorder %s184, %s185
      %p197 = scmp.eq.s32.totalorder %s22, 1
      %p198 = por %p196, %p197
      %p200 = scmp.ne.s32.totalorder %s185, %s199
      %p201 = scmp.eq.s32.totalorder %s22, 0
      %p202 = por %p200, %p201
      %s203 = ssub.s32 %s23, %s35
      %p204 = scmp.eq.s32.totalorder %s203, 0
      %s206 = sadd.s32 %s205, 1
      %s207 = scalar_select %p204, %s205, %s206
      %p210 = pneg %p204
      %p211 = scmp.eq.s32.totalorder %s16, 1
      %p212 = por %p210, %p211
      %p213 = scmp.ne.s32.totalorder %s205, %s208
      %p214 = scmp.eq.s32.totalorder %s16, 0
      %p215 = por %p213, %p214
      %p216 = scmp.ne.s32.totalorder %s205, %s208
      %p217 = scmp.eq.s32.totalorder %s21, 1
      %p218 = por %p216, %p217
      %p219 = scmp.ne.s32.totalorder %s208, %s209
      %p220 = scmp.eq.s32.totalorder %s21, 0
      %p221 = por %p219, %p220
      %p222 = scmp.ne.s32.totalorder %s208, %s209
      %p223 = scmp.eq.s32.totalorder %s22, 1
      %p224 = por %p222, %p223
      %p226 = scmp.ne.s32.totalorder %s209, %s225
      %p227 = scmp.eq.s32.totalorder %s22, 0
      %p228 = por %p226, %p227
      %p229 = scmp.le.s32.totalorder 1, %s16
      %p230 = scmp.lt.s32.totalorder %s16, 3
      %p231 = pnand %p229, %p230
      %p232 = pneg %p231
      // Predicated region
      $region9: #{tpu_custom_call.1} parent=5 // pred_check
        _
      $region10: #{tpu_custom_call.1} parent=5 // pred_check_branch
        %234 = sbr.rel (%p231) target = $region12
      $region11: #{tpu_custom_call.1} parent=5 // pred_region
        %s235 = ssub.s32 %s16, 1
        // Predicated region
        $region13: #{tpu_custom_call.1} parent=11 // pred_check
          %p236 = pneg %p80
        $region14: #{tpu_custom_call.1} parent=11 // pred_check_branch
          %238 = sbr.rel (%p236) target = $region16
        $region15: #{tpu_custom_call.1} parent=11 // pred_region
          %p239 = scmp.lt.s32.totalorder %s26, 0
          %s240 = scalar_select %p239, %s26, 0
          %s241 = smul.addr %s240, 8
          %s242 = scalar_lea.vmem %s1, %s241
        $region16: #{tpu_custom_call.1} parent=11 // pred_fallthru
          _
        // Predicated region
        $region17: #{tpu_custom_call.1} parent=11 // pred_check
          %p243 = pneg %p106
        $region18: #{tpu_custom_call.1} parent=11 // pred_check_branch
          %245 = sbr.rel (%p243) target = $region20
        $region19: #{tpu_custom_call.1} parent=11 // pred_region
          %p246 = scmp.lt.s32.totalorder %s26, 0
          %s247 = scalar_select %p246, %s26, 0
          %s248 = scalar_lea.vmem %s2, %s247
        $region20: #{tpu_custom_call.1} parent=11 // pred_fallthru
          _
        // Predicated region
        $region21: #{tpu_custom_call.1} parent=11 // pred_check
          %p249 = pneg %p132
        $region22: #{tpu_custom_call.1} parent=11 // pred_check_branch
          %251 = sbr.rel (%p249) target = $region24
        $region23: #{tpu_custom_call.1} parent=11 // pred_region
          %s252 = smul.u32 8, %s26
          %p253 = scmp.lt.s32.totalorder %s252, 7
          %s254 = scalar_select %p253, %s252, 7
          %s255 = smul.addr %s254, 8
          %s256 = scalar_lea.vmem %s3, %s255
          %s257 = smul.u32 8, %s26
        $region24: #{tpu_custom_call.1} parent=11 // pred_fallthru
          _
        // Predicated region
        $region25: #{tpu_custom_call.1} parent=11 // pred_check
          %p258 = pneg %p153
        $region26: #{tpu_custom_call.1} parent=11 // pred_check_branch
          %260 = sbr.rel (%p258) target = $region28
        $region27: #{tpu_custom_call.1} parent=11 // pred_region
          _
        $region28: #{tpu_custom_call.1} parent=11 // pred_fallthru
          _
        // Predicated region
        $region29: #{tpu_custom_call.1} parent=11 // pred_check
          %p261 = pneg %p174
        $region30: #{tpu_custom_call.1} parent=11 // pred_check_branch
          %263 = sbr.rel (%p261) target = $region32
        $region31: #{tpu_custom_call.1} parent=11 // pred_region
          _
        $region32: #{tpu_custom_call.1} parent=11 // pred_fallthru
          _
        // Predicated region
        $region33: #{tpu_custom_call.1} parent=11 // pred_check
          %p264 = pneg %p195
        $region34: #{tpu_custom_call.1} parent=11 // pred_check_branch
          %266 = sbr.rel (%p264) target = $region36
        $region35: #{tpu_custom_call.1} parent=11 // pred_region
          _
        $region36: #{tpu_custom_call.1} parent=11 // pred_fallthru
          _
      $region12: #{tpu_custom_call.1} parent=5 // pred_fallthru
        _
      %p267 = scmp.lt.s32.totalorder %s16, 2
      // Predicated region
      $region37: #{tpu_custom_call.1} parent=5 // pred_check
        %p268 = pneg %p267
      $region38: #{tpu_custom_call.1} parent=5 // pred_check_branch
        %270 = sbr.rel (%p268) target = $region40
      $region39: #{tpu_custom_call.1} parent=5 // pred_region
        // Predicated region
        $region41: #{tpu_custom_call.1} parent=39 // pred_check
          %p271 = pneg %p48
        $region42: #{tpu_custom_call.1} parent=39 // pred_check_branch
          %273 = sbr.rel (%p271) target = $region44
        $region43: #{tpu_custom_call.1} parent=39 // pred_region
          %p274 = scmp.lt.s32.totalorder %s23, 1
          %s275 = scalar_select %p274, %s23, 1
          %s276 = smul.addr %s275, 8
          %s277 = scalar_lea.vmem %s0, %s276
        $region44: #{tpu_custom_call.1} parent=39 // pred_fallthru
          _
      $region40: #{tpu_custom_call.1} parent=5 // pred_fallthru
        _
      %p278 = scmp.le.s32.totalorder 1, %s16
      %p279 = scmp.lt.s32.totalorder %s16, 3
      %p280 = pnand %p278, %p279
      %p281 = pneg %p280
      // Predicated region
      $region45: #{tpu_custom_call.1} parent=5 // pred_check
        _
      $region46: #{tpu_custom_call.1} parent=5 // pred_check_branch
        %283 = sbr.rel (%p280) target = $region48
      $region47: #{tpu_custom_call.1} parent=5 // pred_region
        %s284 = ssub.s32 %s16, 1
        %p285 = scmp.lt.s32.totalorder %s25, 1
        %s286 = scalar_select %p285, %s25, 1
        %s287 = smul.addr %s286, 8
        %s288 = scalar_lea.vmem %s0, %s287
        %p289 = pneg %p54
        %p290 = pneg %p51
        %p291 = scmp.lt.s32.totalorder %s26, 0
        %s292 = scalar_select %p291, %s26, 0
        %s293 = smul.addr %s292, 8
        %s294 = scalar_lea.vmem %s1, %s293
        %p295 = pneg %p80
        %p296 = pneg %p77
        %p297 = scmp.lt.s32.totalorder %s26, 0
        %s298 = scalar_select %p297, %s26, 0
        %s299 = scalar_lea.vmem %s2, %s298
        %p300 = pneg %p106
        %p301 = pneg %p103
        %s302 = smul.u32 8, %s26
        %p303 = scmp.lt.s32.totalorder %s302, 7
        %s304 = scalar_select %p303, %s302, 7
        %s305 = smul.addr %s304, 8
        %s306 = scalar_lea.vmem %s3, %s305
        %p307 = pneg %p132
        %p308 = pneg %p129
        %p309 = pneg %p153
        %p310 = pneg %p150
        %p311 = pneg %p174
        %p312 = pneg %p171
        %p313 = pneg %p195
        %p314 = pneg %p192
        %p315 = pneg %p221
        %p316 = pneg %p218
        %s317 = sand.u32 %s208, 1
        %s318 = scalar_lea.sflag [#allocation4], %s317
        %s319 = sand.u32 %s208, 1
        %s320 = smul.addr %s319, 8
        %s321 = scalar_lea.vmem [#allocation3], %s320
        %p322 = scmp.lt.s32.totalorder %s25, 1
        %s323 = scalar_select %p322, %s25, 1
        %s324 = smul.addr %s323, 8
        %s325 = scalar_lea.vmem %s0, %s324
        %p326 = scmp.lt.s32.totalorder %s26, 0
        %s327 = scalar_select %p326, %s26, 0
        %s328 = smul.addr %s327, 8
        %s329 = scalar_lea.vmem %s1, %s328
        %p330 = scmp.lt.s32.totalorder %s26, 0
        %s331 = scalar_select %p330, %s26, 0
        %s332 = scalar_lea.vmem %s2, %s331
        %s333 = smul.u32 8, %s26
        %p334 = scmp.lt.s32.totalorder %s333, 7
        %s335 = scalar_select %p334, %s333, 7
        %s336 = smul.addr %s335, 8
        %s337 = scalar_lea.vmem %s3, %s336
        %s338 = smul.u32 8, %s26
        %p339 = scmp.eq.s32.totalorder %s26, 0
        // Predicated region
        $region49: #{tpu_custom_call.1} parent=47 // pred_check
          %p340 = pneg %p339
        $region50: #{tpu_custom_call.1} parent=47 // pred_check_branch
          %342 = sbr.rel (%p340) target = $region52
        $region51: #{tpu_custom_call.1} parent=47 // pred_region
          %vm343 = vcmask 261120
          %344 = vst.msk [vmem:[#allocation2] sm:$0xff] %vm343, 0.0
        $region52: #{tpu_custom_call.1} parent=47 // pred_fallthru
          _
        %v345 = vld [vmem:[%s325] sm:$0xff]
        %v346 = vld [vmem:[%s329] sm:$0xff]
        %v347 = vld [vmem:[%s329 + $0x8] sm:$0xff]
        %v348 = vld [vmem:[%s329 + $0x10] sm:$0xff]
        %v349 = vld [vmem:[%s329 + $0x18] sm:$0xff]
        %v350 = vld [vmem:[%s332] sm:$0x1]
        %v352 = vperm.slane %v350, 0
        %vm354 = vcmask 261120
        %v356 = vsel %vm354, %v345, 0
        %358 = vmatpush.msra.mxu0 0.0
        %359 = vmatpush.msra.mxu0 0.0
        %360 = vmatpush.msra.mxu0 0.0
        %361 = vmatpush.msra.mxu0 0.0
        %362 = vmatpush.msra.mxu0 0.0
        %363 = vmatpush.msra.mxu0 0.0
        %364 = vmatpush.msra.mxu0 0.0
        %365 = vmatpush.msra.mxu0 0.0
        %366 = vmatpush.msra.mxu0 0.0
        %367 = vmatpush.msra.mxu0 0.0
        %368 = vmatpush.msra.mxu0 0.0
        %369 = vmatpush.msra.mxu0 0.0
        %370 = vmatpush.msra.mxu0 %v349
        %371 = vmatpush.msra.mxu0 %v348
        %372 = vmatpush.msra.mxu0 %v347
        %373 = vmatpush.msra.mxu0 %v346
        %374 = vmatmul.f32.gmra.mxu0 %v356
        %v375 = vpop.f32.mrf.mxu0
        %v376 = vadd.f32 %v352, %v375
        %377 = vdwg.mxu0
        %v378 = vmax.f32 %v376, 0.0
        %v379 = vld [vmem:[#allocation2] sm:$0xff]
        %v380 = vld [vmem:[%s337] sm:$0xff]
        %v381 = vld [vmem:[%s337 + $0x8] sm:$0xff]
        %v382 = vld [vmem:[%s337 + $0x10] sm:$0xff]
        %v383 = vld [vmem:[%s337 + $0x18] sm:$0xff]
        %v384 = vld [vmem:[%s337 + $0x20] sm:$0xff]
        %v385 = vld [vmem:[%s337 + $0x28] sm:$0xff]
        %v386 = vld [vmem:[%s337 + $0x30] sm:$0xff]
        %v387 = vld [vmem:[%s337 + $0x38] sm:$0xff]
        %vm388 = vcmask 523264
        %v390 = vsel %vm388, %v378, 0
        %392 = vmatpush.msra.mxu0 0.0
        %393 = vmatpush.msra.mxu0 0.0
        %394 = vmatpush.msra.mxu0 0.0
        %395 = vmatpush.msra.mxu0 0.0
        %396 = vmatpush.msra.mxu0 0.0
        %397 = vmatpush.msra.mxu0 0.0
        %398 = vmatpush.msra.mxu0 0.0
        %399 = vmatpush.msra.mxu0 0.0
        %400 = vmatpush.msra.mxu0 %v387
        %401 = vmatpush.msra.mxu0 %v386
        %402 = vmatpush.msra.mxu0 %v385
        %403 = vmatpush.msra.mxu0 %v384
        %404 = vmatpush.msra.mxu0 %v383
        %405 = vmatpush.msra.mxu0 %v382
        %406 = vmatpush.msra.mxu0 %v381
        %407 = vmatpush.msra.mxu0 %v380
        %408 = vmatmul.f32.gmra.mxu0 %v390
        %v409 = vpop.f32.mrf.mxu0
        %v410 = vadd.f32 0.0, %v409
        %411 = vdwg.mxu0
        %v412 = vadd.f32 %v379, %v410
        %413 = vst.msk [vmem:[#allocation2] sm:$0xff] %vm354, %v412
        // Predicated region
        $region53: #{tpu_custom_call.1} parent=47 // pred_check
          %p414 = pneg %p339
        $region54: #{tpu_custom_call.1} parent=47 // pred_check_branch
          %416 = sbr.rel (%p414) target = $region56
        $region55: #{tpu_custom_call.1} parent=47 // pred_region
          %v417 = vld [vmem:[#allocation2] sm:$0xff]
          %v418 = vld [vmem:[%s4] sm:$0x1]
          %v420 = vperm.slane %v418, 0
          %v422 = vadd.f32 %v417, %v420
          %v423 = vadd.f32 %v345, %v422
          %v424 = vsel %vm354, %v423, 0.0
          %425 = vadd.xlane.f32.xlu0 %v424
          %v426 = vpop.xlane.xlu0 %425
          %v427 = vmul.f32 %v426, 0.03125
          %v428 = vsub.f32 %v423, %v427
          %v429 = vmul.f32 %v428, %v428
          %v430 = vsel %vm354, %v429, 0.0
          %431 = vadd.xlane.f32.xlu0 %v430
          %v432 = vpop.xlane.xlu0 %431
          %v433 = vmul.f32 %v432, 0.03125
          %v434 = vadd.f32 %v433, 1e-05
          %v435 = vrsqrt.pop %v434
          %v436 = vmul.f32 %v435, %v434
          %v437 = vmul.f32 %v436, %v435
          %v438 = vmul.f32 0.5, %v437
          %v439 = vsub.f32 1.5, %v438
          %v440 = vmul.f32 %v435, %v439
          %vm441 = vweird.f32 %v434
          %vm442 = vweird.f32 %v435
          %vm443 = vmor %vm441, %vm442
          %v444 = vsel %vm443, %v435, %v440
          %v445 = vmul.f32 %v428, %v444
          %v446 = vld [vmem:[%s5] sm:$0x1]
          %v448 = vperm.slane %v446, 0
          %v450 = vmul.f32 %v445, %v448
          %v451 = vld [vmem:[%s6] sm:$0x1]
          %v453 = vperm.slane %v451, 0
          %v455 = vadd.f32 %v450, %v453
          %456 = vst.msk [vmem:[%s321] sm:$0xff] %vm354, %v455
        $region56: #{tpu_custom_call.1} parent=47 // pred_fallthru
          _
        %s457 = sand.u32 %s208, 1
        %s458 = scalar_lea.sflag [#allocation4], %s457
        %s459 = sand.u32 %s208, 1
        %s460 = smul.addr %s459, 8
        %s461 = scalar_lea.vmem [#allocation3], %s460
        // Predicated region
        $region57: #{tpu_custom_call.1} parent=47 // pred_check
          %p462 = pneg %p218
        $region58: #{tpu_custom_call.1} parent=47 // pred_check_branch
          %464 = sbr.rel (%p462) target = $region60
        $region59: #{tpu_custom_call.1} parent=47 // pred_region
          %466 = vsyncadd %s458, 0
          %s467 = smul.addr %s25, 8
          %s468 = scalar_lea.hbm %s7, %s467
          %s470 = sshll.u32 %s461, 4
          %s471 = int_to_ptr.vmem [resolvable:$true] %s470
          %s472 = sshll.u32 %s468, 4
          %s473 = int_to_ptr.hbm [resolvable:$true] %s472
          %475 = dma.vmem_to_hbm [thread:$0]  %s471, 128, %s473, %s458
        $region60: #{tpu_custom_call.1} parent=47 // pred_fallthru
          _
      $region48: #{tpu_custom_call.1} parent=5 // pred_fallthru
        _
      %p476 = scmp.le.s32.totalorder 2, %s16
      // Predicated region
      $region61: #{tpu_custom_call.1} parent=5 // pred_check
        %p477 = pneg %p476
      $region62: #{tpu_custom_call.1} parent=5 // pred_check_branch
        %479 = sbr.rel (%p477) target = $region64
      $region63: #{tpu_custom_call.1} parent=5 // pred_region
        %s480 = ssub.s32 %s16, 2
        // Predicated region
        $region65: #{tpu_custom_call.1} parent=63 // pred_check
          %p481 = pneg %p224
        $region66: #{tpu_custom_call.1} parent=63 // pred_check_branch
          %483 = sbr.rel (%p481) target = $region68
        $region67: #{tpu_custom_call.1} parent=63 // pred_region
          %s484 = sand.u32 %s209, 1
          %s485 = scalar_lea.sflag [#allocation4], %s484
          %s486 = sand.u32 %s209, 1
          %s487 = smul.addr %s486, 8
          %s488 = scalar_lea.vmem [#allocation3], %s487
          %490 = dma.done %s485, 128
        $region68: #{tpu_custom_call.1} parent=63 // pred_fallthru
          _
      $region64: #{tpu_custom_call.1} parent=5 // pred_fallthru
        _
    $region6: #{tpu_custom_call.1} parent=1 // loop_footer
      %s20 = sadd.s32 1, %s16
    $region7: #{tpu_custom_call.1} parent=1 // loop_footer_branch
      %15 = sbr.rel target = $region3
    $region8: #{tpu_custom_call.1} parent=1 // loop_exit
      _
    %491 = vsyncpa [#allocation4], 1
    %s492 = scalar_lea.sflag [#allocation4], 1
    %493 = vsyncpa %s492, 1

// kernel: tpu_custom_call.1
$region0: #{tpu_custom_call.1}
  #allocation0 [shape = 'u32[]', space=smem, size = 0x4, offset = 0x4, fixed_abs, tag = 'smem constant byte address 0x4 - core index']
  #allocation1 [shape = 'u32[72,128]{1,0:T(1,128)}', space=vmem, size = 0x9000, scoped, tag = 'internal scratch']
  #allocation2 [shape = 'f32[8,32]{1,0:T(8,128)}', space=vmem, size = 0x1000, scoped, tag = 'scratch operand']
  %s0 = inlined_call_operand.vmem [shape: f32[16,32], index: 0, kind: input, shape index: {}]
  %s1 = inlined_call_operand.vmem [shape: f32[32,64], index: 1, kind: input, shape index: {}]
  %s2 = inlined_call_operand.vmem [shape: f32[1,64], index: 2, kind: input, shape index: {}]
  %s3 = inlined_call_operand.vmem [shape: f32[64,32], index: 3, kind: input, shape index: {}]
  %s4 = inlined_call_operand.vmem [shape: f32[1,32], index: 4, kind: input, shape index: {}]
  %s5 = inlined_call_operand.vmem [shape: f32[1,32], index: 5, kind: input, shape index: {}]
  %s6 = inlined_call_operand.vmem [shape: f32[1,32], index: 6, kind: input, shape index: {}]
  %s7 = inlined_call_operand.hbm [shape: f32[16,32], index: 7, kind: output, shape index: {}]
  %s8 = sld [smem:[#allocation0]]
  $region69: #{tpu_custom_call.1} parent=0
    _
  %s10 = ssub.s32 1, %s8
  %s11 = scalar_select 0, %s10, %s8
  $region1: #{tpu_custom_call.1} parent=0
    #allocation3 [shape = 'u8[8192]{0}', space=vmem, size = 0x2000, scoped, tag = 'output window, operand 0']
    #allocation4 [shape = 's32[2]{0}', space=sflag, size = 0x8, scoped, tag = 'scoped memory for tpu_custom_call.1']
    %12 = vsyncpa [#allocation4], 0
    %s13 = scalar_lea.sflag [#allocation4], 1
    %14 = vsyncpa %s13, 0
    loop: start=0, step=1, limit=4
    $region2: #{tpu_custom_call.1} parent=1 // loop_pre_header
      _
    $region3: #{tpu_custom_call.1} parent=1 // loop_header
      %s16 = sphi 0, %s20
      %p17 = scmp.ge.s32.totalorder %s16, 4
      %s23 = sphi 0, %s35
      %s24 = sphi 0, %s31
      %s25 = sphi 0, %s23
      %s26 = sphi 0, %s24
      %s27 = sphi 0, %s25
      %s28 = sphi 0, %s26
      %s38 = sphi 0, %s40
      %s41 = sphi 0, %s38
      %s42 = sphi 0, %s41
      %s58 = sphi 0, %s42
      %s64 = sphi 0, %s66
      %s67 = sphi 0, %s64
      %s68 = sphi 0, %s67
      %s84 = sphi 0, %s68
      %s90 = sphi 0, %s92
      %s93 = sphi 0, %s90
      %s94 = sphi 0, %s93
      %s110 = sphi 0, %s94
      %s116 = sphi 0, %s118
      %s119 = sphi 0, %s116
      %s120 = sphi 0, %s119
      %s136 = sphi 0, %s120
      %s140 = sphi 0, %s140
      %s142 = sphi 0, %s140
      %s143 = sphi 0, %s142
      %s157 = sphi 0, %s143
      %s161 = sphi 0, %s161
      %s163 = sphi 0, %s161
      %s164 = sphi 0, %s163
      %s178 = sphi 0, %s164
      %s182 = sphi 0, %s182
      %s184 = sphi 0, %s182
      %s185 = sphi 0, %s184
      %s199 = sphi 0, %s185
      %s205 = sphi 0, %s207
      %s208 = sphi 0, %s205
      %s209 = sphi 0, %s208
      %s225 = sphi 0, %s209
    $region4: #{tpu_custom_call.1} parent=1 // loop_header_branch
      %19 = sbr.rel (%p17) target = $region8
    $region5: #{tpu_custom_call.1} parent=1 // loop_body
      %s21 = ssub.s32 %s16, 1
      %s22 = ssub.s32 %s16, 2
      %s29 = sadd.s32 1, %s24
      %p30 = scmp.ge.s32.totalorder %s29, 1
      %s31 = scalar_select %p30, 0, %s29
      %s32 = sadd.s32 1, %s23
      %s33 = scalar_select %p30, %s32, %s23
      %p34 = scmp.ge.s32.totalorder %s33, 2
      %s35 = scalar_select %p34, 0, %s33
      %s36 = ssub.s32 %s23, %s35
      %p37 = scmp.eq.s32.totalorder %s36, 0
      %s39 = sadd.s32 %s38, 1
      %s40 = scalar_select %p37, %s38, %s39
      %p43 = pneg %p37
      %p44 = scmp.eq.s32.totalorder %s16, 1
      %p45 = por %p43, %p44
      %p46 = scmp.ne.s32.totalorder %s38, %s41
      %p47 = scmp.eq.s32.totalorder %s16, 0
      %p48 = por %p46, %p47
      %p49 = scmp.ne.s32.totalorder %s38, %s41
      %p50 = scmp.eq.s32.totalorder %s21, 1
      %p51 = por %p49, %p50
      %p52 = scmp.ne.s32.totalorder %s41, %s42
      %p53 = scmp.eq.s32.totalorder %s21, 0
      %p54 = por %p52, %p53
      %p55 = scmp.ne.s32.totalorder %s41, %s42
      %p56 = scmp.eq.s32.totalorder %s22, 1
      %p57 = por %p55, %p56
      %p59 = scmp.ne.s32.totalorder %s42, %s58
      %p60 = scmp.eq.s32.totalorder %s22, 0
      %p61 = por %p59, %p60
      %s62 = ssub.s32 %s24, %s31
      %p63 = scmp.eq.s32.totalorder %s62, 0
      %s65 = sadd.s32 %s64, 1
      %s66 = scalar_select %p63, %s64, %s65
      %p69 = pneg %p63
      %p70 = scmp.eq.s32.totalorder %s16, 1
      %p71 = por %p69, %p70
      %p72 = scmp.ne.s32.totalorder %s64, %s67
      %p73 = scmp.eq.s32.totalorder %s16, 0
      %p74 = por %p72, %p73
      %p75 = scmp.ne.s32.totalorder %s64, %s67
      %p76 = scmp.eq.s32.totalorder %s21, 1
      %p77 = por %p75, %p76
      %p78 = scmp.ne.s32.totalorder %s67, %s68
      %p79 = scmp.eq.s32.totalorder %s21, 0
      %p80 = por %p78, %p79
      %p81 = scmp.ne.s32.totalorder %s67, %s68
      %p82 = scmp.eq.s32.totalorder %s22, 1
      %p83 = por %p81, %p82
      %p85 = scmp.ne.s32.totalorder %s68, %s84
      %p86 = scmp.eq.s32.totalorder %s22, 0
      %p87 = por %p85, %p86
      %s88 = ssub.s32 %s24, %s31
      %p89 = scmp.eq.s32.totalorder %s88, 0
      %s91 = sadd.s32 %s90, 1
      %s92 = scalar_select %p89, %s90, %s91
      %p95 = pneg %p89
      %p96 = scmp.eq.s32.totalorder %s16, 1
      %p97 = por %p95, %p96
      %p98 = scmp.ne.s32.totalorder %s90, %s93
      %p99 = scmp.eq.s32.totalorder %s16, 0
      %p100 = por %p98, %p99
      %p101 = scmp.ne.s32.totalorder %s90, %s93
      %p102 = scmp.eq.s32.totalorder %s21, 1
      %p103 = por %p101, %p102
      %p104 = scmp.ne.s32.totalorder %s93, %s94
      %p105 = scmp.eq.s32.totalorder %s21, 0
      %p106 = por %p104, %p105
      %p107 = scmp.ne.s32.totalorder %s93, %s94
      %p108 = scmp.eq.s32.totalorder %s22, 1
      %p109 = por %p107, %p108
      %p111 = scmp.ne.s32.totalorder %s94, %s110
      %p112 = scmp.eq.s32.totalorder %s22, 0
      %p113 = por %p111, %p112
      %s114 = ssub.s32 %s24, %s31
      %p115 = scmp.eq.s32.totalorder %s114, 0
      %s117 = sadd.s32 %s116, 1
      %s118 = scalar_select %p115, %s116, %s117
      %p121 = pneg %p115
      %p122 = scmp.eq.s32.totalorder %s16, 1
      %p123 = por %p121, %p122
      %p124 = scmp.ne.s32.totalorder %s116, %s119
      %p125 = scmp.eq.s32.totalorder %s16, 0
      %p126 = por %p124, %p125
      %p127 = scmp.ne.s32.totalorder %s116, %s119
      %p128 = scmp.eq.s32.totalorder %s21, 1
      %p129 = por %p127, %p128
      %p130 = scmp.ne.s32.totalorder %s119, %s120
      %p131 = scmp.eq.s32.totalorder %s21, 0
      %p132 = por %p130, %p131
      %p133 = scmp.ne.s32.totalorder %s119, %s120
      %p134 = scmp.eq.s32.totalorder %s22, 1
      %p135 = por %p133, %p134
      %p137 = scmp.ne.s32.totalorder %s120, %s136
      %p138 = scmp.eq.s32.totalorder %s22, 0
      %p139 = por %p137, %p138
      %s141 = sadd.s32 %s140, 1
      %p144 = scmp.eq.s32.totalorder %s16, 1
      %p145 = scmp.ne.s32.totalorder %s140, %s142
      %p146 = scmp.eq.s32.totalorder %s16, 0
      %p147 = por %p145, %p146
      %p148 = scmp.ne.s32.totalorder %s140, %s142
      %p149 = scmp.eq.s32.totalorder %s21, 1
      %p150 = por %p148, %p149
      %p151 = scmp.ne.s32.totalorder %s142, %s143
      %p152 = scmp.eq.s32.totalorder %s21, 0
      %p153 = por %p151, %p152
      %p154 = scmp.ne.s32.totalorder %s142, %s143
      %p155 = scmp.eq.s32.totalorder %s22, 1
      %p156 = por %p154, %p155
      %p158 = scmp.ne.s32.totalorder %s143, %s157
      %p159 = scmp.eq.s32.totalorder %s22, 0
      %p160 = por %p158, %p159
      %s162 = sadd.s32 %s161, 1
      %p165 = scmp.eq.s32.totalorder %s16, 1
      %p166 = scmp.ne.s32.totalorder %s161, %s163
      %p167 = scmp.eq.s32.totalorder %s16, 0
      %p168 = por %p166, %p167
      %p169 = scmp.ne.s32.totalorder %s161, %s163
      %p170 = scmp.eq.s32.totalorder %s21, 1
      %p171 = por %p169, %p170
      %p172 = scmp.ne.s32.totalorder %s163, %s164
      %p173 = scmp.eq.s32.totalorder %s21, 0
      %p174 = por %p172, %p173
      %p175 = scmp.ne.s32.totalorder %s163, %s164
      %p176 = scmp.eq.s32.totalorder %s22, 1
      %p177 = por %p175, %p176
      %p179 = scmp.ne.s32.totalorder %s164, %s178
      %p180 = scmp.eq.s32.totalorder %s22, 0
      %p181 = por %p179, %p180
      %s183 = sadd.s32 %s182, 1
      %p186 = scmp.eq.s32.totalorder %s16, 1
      %p187 = scmp.ne.s32.totalorder %s182, %s184
      %p188 = scmp.eq.s32.totalorder %s16, 0
      %p189 = por %p187, %p188
      %p190 = scmp.ne.s32.totalorder %s182, %s184
      %p191 = scmp.eq.s32.totalorder %s21, 1
      %p192 = por %p190, %p191
      %p193 = scmp.ne.s32.totalorder %s184, %s185
      %p194 = scmp.eq.s32.totalorder %s21, 0
      %p195 = por %p193, %p194
      %p196 = scmp.ne.s32.totalorder %s184, %s185
      %p197 = scmp.eq.s32.totalorder %s22, 1
      %p198 = por %p196, %p197
      %p200 = scmp.ne.s32.totalorder %s185, %s199
      %p201 = scmp.eq.s32.totalorder %s22, 0
      %p202 = por %p200, %p201
      %s203 = ssub.s32 %s23, %s35
      %p204 = scmp.eq.s32.totalorder %s203, 0
      %s206 = sadd.s32 %s205, 1
      %s207 = scalar_select %p204, %s205, %s206
      %p210 = pneg %p204
      %p211 = scmp.eq.s32.totalorder %s16, 1
      %p212 = por %p210, %p211
      %p213 = scmp.ne.s32.totalorder %s205, %s208
      %p214 = scmp.eq.s32.totalorder %s16, 0
      %p215 = por %p213, %p214
      %p216 = scmp.ne.s32.totalorder %s205, %s208
      %p217 = scmp.eq.s32.totalorder %s21, 1
      %p218 = por %p216, %p217
      %p219 = scmp.ne.s32.totalorder %s208, %s209
      %p220 = scmp.eq.s32.totalorder %s21, 0
      %p221 = por %p219, %p220
      %p222 = scmp.ne.s32.totalorder %s208, %s209
      %p223 = scmp.eq.s32.totalorder %s22, 1
      %p224 = por %p222, %p223
      %p226 = scmp.ne.s32.totalorder %s209, %s225
      %p227 = scmp.eq.s32.totalorder %s22, 0
      %p228 = por %p226, %p227
      %p229 = scmp.le.s32.totalorder 1, %s16
      %p230 = scmp.lt.s32.totalorder %s16, 3
      %p231 = pnand %p229, %p230
      %p232 = pneg %p231
      // Predicated region
      $region9: #{tpu_custom_call.1} parent=5 // pred_check
        _
      $region10: #{tpu_custom_call.1} parent=5 // pred_check_branch
        %234 = sbr.rel (%p231) target = $region12
      $region11: #{tpu_custom_call.1} parent=5 // pred_region
        %s235 = ssub.s32 %s16, 1
        // Predicated region
        $region13: #{tpu_custom_call.1} parent=11 // pred_check
          %p236 = pneg %p80
        $region14: #{tpu_custom_call.1} parent=11 // pred_check_branch
          %238 = sbr.rel (%p236) target = $region16
        $region15: #{tpu_custom_call.1} parent=11 // pred_region
          %p239 = scmp.lt.s32.totalorder %s26, 0
          %s240 = scalar_select %p239, %s26, 0
          %s241 = smul.addr %s240, 8
          %s242 = scalar_lea.vmem %s1, %s241
        $region16: #{tpu_custom_call.1} parent=11 // pred_fallthru
          _
        // Predicated region
        $region17: #{tpu_custom_call.1} parent=11 // pred_check
          %p243 = pneg %p106
        $region18: #{tpu_custom_call.1} parent=11 // pred_check_branch
          %245 = sbr.rel (%p243) target = $region20
        $region19: #{tpu_custom_call.1} parent=11 // pred_region
          %p246 = scmp.lt.s32.totalorder %s26, 0
          %s247 = scalar_select %p246, %s26, 0
          %s248 = scalar_lea.vmem %s2, %s247
        $region20: #{tpu_custom_call.1} parent=11 // pred_fallthru
          _
        // Predicated region
        $region21: #{tpu_custom_call.1} parent=11 // pred_check
          %p249 = pneg %p132
        $region22: #{tpu_custom_call.1} parent=11 // pred_check_branch
          %251 = sbr.rel (%p249) target = $region24
        $region23: #{tpu_custom_call.1} parent=11 // pred_region
          %s252 = smul.u32 8, %s26
          %p253 = scmp.lt.s32.totalorder %s252, 7
          %s254 = scalar_select %p253, %s252, 7
          %s255 = smul.addr %s254, 8
          %s256 = scalar_lea.vmem %s3, %s255
          %s257 = smul.u32 8, %s26
        $region24: #{tpu_custom_call.1} parent=11 // pred_fallthru
          _
        // Predicated region
        $region25: #{tpu_custom_call.1} parent=11 // pred_check
          %p258 = pneg %p153
        $region26: #{tpu_custom_call.1} parent=11 // pred_check_branch
          %260 = sbr.rel (%p258) target = $region28
        $region27: #{tpu_custom_call.1} parent=11 // pred_region
          _
        $region28: #{tpu_custom_call.1} parent=11 // pred_fallthru
          _
        // Predicated region
        $region29: #{tpu_custom_call.1} parent=11 // pred_check
          %p261 = pneg %p174
        $region30: #{tpu_custom_call.1} parent=11 // pred_check_branch
          %263 = sbr.rel (%p261) target = $region32
        $region31: #{tpu_custom_call.1} parent=11 // pred_region
          _
        $region32: #{tpu_custom_call.1} parent=11 // pred_fallthru
          _
        // Predicated region
        $region33: #{tpu_custom_call.1} parent=11 // pred_check
          %p264 = pneg %p195
        $region34: #{tpu_custom_call.1} parent=11 // pred_check_branch
          %266 = sbr.rel (%p264) target = $region36
        $region35: #{tpu_custom_call.1} parent=11 // pred_region
          _
        $region36: #{tpu_custom_call.1} parent=11 // pred_fallthru
          _
      $region12: #{tpu_custom_call.1} parent=5 // pred_fallthru
        _
      %p267 = scmp.lt.s32.totalorder %s16, 2
      // Predicated region
      $region37: #{tpu_custom_call.1} parent=5 // pred_check
        %p268 = pneg %p267
      $region38: #{tpu_custom_call.1} parent=5 // pred_check_branch
        %270 = sbr.rel (%p268) target = $region40
      $region39: #{tpu_custom_call.1} parent=5 // pred_region
        // Predicated region
        $region41: #{tpu_custom_call.1} parent=39 // pred_check
          %p271 = pneg %p48
        $region42: #{tpu_custom_call.1} parent=39 // pred_check_branch
          %273 = sbr.rel (%p271) target = $region44
        $region43: #{tpu_custom_call.1} parent=39 // pred_region
          %p274 = scmp.lt.s32.totalorder %s23, 1
          %s275 = scalar_select %p274, %s23, 1
          %s276 = smul.addr %s275, 8
          %s277 = scalar_lea.vmem %s0, %s276
        $region44: #{tpu_custom_call.1} parent=39 // pred_fallthru
          _
      $region40: #{tpu_custom_call.1} parent=5 // pred_fallthru
        _
      %p278 = scmp.le.s32.totalorder 1, %s16
      %p279 = scmp.lt.s32.totalorder %s16, 3
      %p280 = pnand %p278, %p279
      %p281 = pneg %p280
      // Predicated region
      $region45: #{tpu_custom_call.1} parent=5 // pred_check
        _
      $region46: #{tpu_custom_call.1} parent=5 // pred_check_branch
        %283 = sbr.rel (%p280) target = $region48
      $region47: #{tpu_custom_call.1} parent=5 // pred_region
        %s284 = ssub.s32 %s16, 1
        %p285 = scmp.lt.s32.totalorder %s25, 1
        %s286 = scalar_select %p285, %s25, 1
        %s287 = smul.addr %s286, 8
        %s288 = scalar_lea.vmem %s0, %s287
        %p289 = pneg %p54
        %p290 = pneg %p51
        %p291 = scmp.lt.s32.totalorder %s26, 0
        %s292 = scalar_select %p291, %s26, 0
        %s293 = smul.addr %s292, 8
        %s294 = scalar_lea.vmem %s1, %s293
        %p295 = pneg %p80
        %p296 = pneg %p77
        %p297 = scmp.lt.s32.totalorder %s26, 0
        %s298 = scalar_select %p297, %s26, 0
        %s299 = scalar_lea.vmem %s2, %s298
        %p300 = pneg %p106
        %p301 = pneg %p103
        %s302 = smul.u32 8, %s26
        %p303 = scmp.lt.s32.totalorder %s302, 7
        %s304 = scalar_select %p303, %s302, 7
        %s305 = smul.addr %s304, 8
        %s306 = scalar_lea.vmem %s3, %s305
        %p307 = pneg %p132
        %p308 = pneg %p129
        %p309 = pneg %p153
        %p310 = pneg %p150
        %p311 = pneg %p174
        %p312 = pneg %p171
        %p313 = pneg %p195
        %p314 = pneg %p192
        %p315 = pneg %p221
        %p316 = pneg %p218
        %s317 = sand.u32 %s208, 1
        %s318 = scalar_lea.sflag [#allocation4], %s317
        %s319 = sand.u32 %s208, 1
        %s320 = smul.addr %s319, 8
        %s321 = scalar_lea.vmem [#allocation3], %s320
        %p322 = scmp.lt.s32.totalorder %s25, 1
        %s323 = scalar_select %p322, %s25, 1
        %s324 = smul.addr %s323, 8
        %s325 = scalar_lea.vmem %s0, %s324
        %p326 = scmp.lt.s32.totalorder %s26, 0
        %s327 = scalar_select %p326, %s26, 0
        %s328 = smul.addr %s327, 8
        %s329 = scalar_lea.vmem %s1, %s328
        %p330 = scmp.lt.s32.totalorder %s26, 0
        %s331 = scalar_select %p330, %s26, 0
        %s332 = scalar_lea.vmem %s2, %s331
        %s333 = smul.u32 8, %s26
        %p334 = scmp.lt.s32.totalorder %s333, 7
        %s335 = scalar_select %p334, %s333, 7
        %s336 = smul.addr %s335, 8
        %s337 = scalar_lea.vmem %s3, %s336
        %s338 = smul.u32 8, %s26
        %p339 = scmp.eq.s32.totalorder %s26, 0
        // Predicated region
        $region49: #{tpu_custom_call.1} parent=47 // pred_check
          %p340 = pneg %p339
        $region50: #{tpu_custom_call.1} parent=47 // pred_check_branch
          %342 = sbr.rel (%p340) target = $region52
        $region51: #{tpu_custom_call.1} parent=47 // pred_region
          %vm343 = vcmask 261120
          %344 = vst.msk [vmem:[#allocation2] sm:$0xff] %vm343, 0.0
        $region52: #{tpu_custom_call.1} parent=47 // pred_fallthru
          _
        %v345 = vld [vmem:[%s325] sm:$0xff]
        %v346 = vld [vmem:[%s329] sm:$0xff]
        %v347 = vld [vmem:[%s329 + $0x8] sm:$0xff]
        %v348 = vld [vmem:[%s329 + $0x10] sm:$0xff]
        %v349 = vld [vmem:[%s329 + $0x18] sm:$0xff]
        %v350 = vld [vmem:[%s332] sm:$0x1]
        %v352 = vperm.slane %v350, 0
        %vm354 = vcmask 261120
        %v356 = vsel %vm354, %v345, 0
        %358 = vmatpush.msra.mxu0 0.0
        %359 = vmatpush.msra.mxu0 0.0
        %360 = vmatpush.msra.mxu0 0.0
        %361 = vmatpush.msra.mxu0 0.0
        %362 = vmatpush.msra.mxu0 0.0
        %363 = vmatpush.msra.mxu0 0.0
        %364 = vmatpush.msra.mxu0 0.0
        %365 = vmatpush.msra.mxu0 0.0
        %366 = vmatpush.msra.mxu0 0.0
        %367 = vmatpush.msra.mxu0 0.0
        %368 = vmatpush.msra.mxu0 0.0
        %369 = vmatpush.msra.mxu0 0.0
        %370 = vmatpush.msra.mxu0 %v349
        %371 = vmatpush.msra.mxu0 %v348
        %372 = vmatpush.msra.mxu0 %v347
        %373 = vmatpush.msra.mxu0 %v346
        %374 = vmatmul.f32.gmra.mxu0 %v356
        %v375 = vpop.f32.mrf.mxu0
        %v376 = vadd.f32 %v352, %v375
        %377 = vdwg.mxu0
        %v378 = vmax.f32 %v376, 0.0
        %v379 = vld [vmem:[#allocation2] sm:$0xff]
        %v380 = vld [vmem:[%s337] sm:$0xff]
        %v381 = vld [vmem:[%s337 + $0x8] sm:$0xff]
        %v382 = vld [vmem:[%s337 + $0x10] sm:$0xff]
        %v383 = vld [vmem:[%s337 + $0x18] sm:$0xff]
        %v384 = vld [vmem:[%s337 + $0x20] sm:$0xff]
        %v385 = vld [vmem:[%s337 + $0x28] sm:$0xff]
        %v386 = vld [vmem:[%s337 + $0x30] sm:$0xff]
        %v387 = vld [vmem:[%s337 + $0x38] sm:$0xff]
        %vm388 = vcmask 523264
        %v390 = vsel %vm388, %v378, 0
        %392 = vmatpush.msra.mxu0 0.0
        %393 = vmatpush.msra.mxu0 0.0
        %394 = vmatpush.msra.mxu0 0.0
        %395 = vmatpush.msra.mxu0 0.0
        %396 = vmatpush.msra.mxu0 0.0
        %397 = vmatpush.msra.mxu0 0.0
        %398 = vmatpush.msra.mxu0 0.0
        %399 = vmatpush.msra.mxu0 0.0
        %400 = vmatpush.msra.mxu0 %v387
        %401 = vmatpush.msra.mxu0 %v386
        %402 = vmatpush.msra.mxu0 %v385
        %403 = vmatpush.msra.mxu0 %v384
        %404 = vmatpush.msra.mxu0 %v383
        %405 = vmatpush.msra.mxu0 %v382
        %406 = vmatpush.msra.mxu0 %v381
        %407 = vmatpush.msra.mxu0 %v380
        %408 = vmatmul.f32.gmra.mxu0 %v390
        %v409 = vpop.f32.mrf.mxu0
        %v410 = vadd.f32 0.0, %v409
        %411 = vdwg.mxu0
        %v412 = vadd.f32 %v379, %v410
        %413 = vst.msk [vmem:[#allocation2] sm:$0xff] %vm354, %v412
        // Predicated region
        $region53: #{tpu_custom_call.1} parent=47 // pred_check
          %p414 = pneg %p339
        $region54: #{tpu_custom_call.1} parent=47 // pred_check_branch
          %416 = sbr.rel (%p414) target = $region56
        $region55: #{tpu_custom_call.1} parent=47 // pred_region
          %v417 = vld [vmem:[#allocation2] sm:$0xff]
          %v418 = vld [vmem:[%s4] sm:$0x1]
          %v420 = vperm.slane %v418, 0
          %v422 = vadd.f32 %v417, %v420
          %v423 = vadd.f32 %v345, %v422
          %v424 = vsel %vm354, %v423, 0.0
          %425 = vadd.xlane.f32.xlu0 %v424
          %v426 = vpop.xlane.xlu0 %425
          %v427 = vmul.f32 %v426, 0.03125
          %v428 = vsub.f32 %v423, %v427
          %v429 = vmul.f32 %v428, %v428
          %v430 = vsel %vm354, %v429, 0.0
          %431 = vadd.xlane.f32.xlu0 %v430
          %v432 = vpop.xlane.xlu0 %431
          %v433 = vmul.f32 %v432, 0.03125
          %v434 = vadd.f32 %v433, 1e-05
          %v435 = vrsqrt.pop %v434
          %v436 = vmul.f32 %v435, %v434
          %v437 = vmul.f32 %v436, %v435
          %v438 = vmul.f32 0.5, %v437
          %v439 = vsub.f32 1.5, %v438
          %v440 = vmul.f32 %v435, %v439
          %vm441 = vweird.f32 %v434
          %vm442 = vweird.f32 %v435
          %vm443 = vmor %vm441, %vm442
          %v444 = vsel %vm443, %v435, %v440
          %v445 = vmul.f32 %v428, %v444
          %v446 = vld [vmem:[%s5] sm:$0x1]
          %v448 = vperm.slane %v446, 0
          %v450 = vmul.f32 %v445, %v448
          %v451 = vld [vmem:[%s6] sm:$0x1]
          %v453 = vperm.slane %v451, 0
          %v455 = vadd.f32 %v450, %v453
          %456 = vst.msk [vmem:[%s321] sm:$0xff] %vm354, %v455
        $region56: #{tpu_custom_call.1} parent=47 // pred_fallthru
          _
        %s457 = sand.u32 %s208, 1
        %s458 = scalar_lea.sflag [#allocation4], %s457
        %s459 = sand.u32 %s208, 1
        %s460 = smul.addr %s459, 8
        %s461 = scalar_lea.vmem [#allocation3], %s460
        // Predicated region
        $region57: #{tpu_custom_call.1} parent=47 // pred_check
          %p462 = pneg %p218
        $region58: #{tpu_custom_call.1} parent=47 // pred_check_branch
          %464 = sbr.rel (%p462) target = $region60
        $region59: #{tpu_custom_call.1} parent=47 // pred_region
          %466 = vsyncadd %s458, 0
          %s467 = smul.addr %s25, 8
          %s468 = scalar_lea.hbm %s7, %s467
          %s470 = sshll.u32 %s461, 4
          %s471 = int_to_ptr.vmem [resolvable:$true] %s470
          %s472 = sshll.u32 %s468, 4
          %s473 = int_to_ptr.hbm [resolvable:$true] %s472
          %475 = dma.vmem_to_hbm [thread:$0]  %s471, 128, %s473, %s458
        $region60: #{tpu_custom_call.1} parent=47 // pred_fallthru
          _
      $region48: #{tpu_custom_call.1} parent=5 // pred_fallthru
        _
      %p476 = scmp.le.s32.totalorder 2, %s16
      // Predicated region
      $region61: #{tpu_custom_call.1} parent=5 // pred_check
        %p477 = pneg %p476
      $region62: #{tpu_custom_call.1} parent=5 // pred_check_branch
        %479 = sbr.rel (%p477) target = $region64
      $region63: #{tpu_custom_call.1} parent=5 // pred_region
        %s480 = ssub.s32 %s16, 2
        // Predicated region
        $region65: #{tpu_custom_call.1} parent=63 // pred_check
          %p481 = pneg %p224
        $region66: #{tpu_custom_call.1} parent=63 // pred_check_branch
          %483 = sbr.rel (%p481) target = $region68
        $region67: #{tpu_custom_call.1} parent=63 // pred_region
          %s484 = sand.u32 %s209, 1
          %s485 = scalar_lea.sflag [#allocation4], %s484
          %s486 = sand.u32 %s209, 1
          %s487 = smul.addr %s486, 8
          %s488 = scalar_lea.vmem [#allocation3], %s487
          %490 = dma.done %s485, 128
        $region68: #{tpu_custom_call.1} parent=63 // pred_fallthru
          _
      $region64: #{tpu_custom_call.1} parent=5 // pred_fallthru
        _
    $region6: #{tpu_custom_call.1} parent=1 // loop_footer
      %s20 = sadd.s32 1, %s16
    $region7: #{tpu_custom_call.1} parent=1 // loop_footer_branch
      %15 = sbr.rel target = $region3
    $region8: #{tpu_custom_call.1} parent=1 // loop_exit
      _
    %491 = vsyncpa [#allocation4], 1
    %s492 = scalar_lea.sflag [#allocation4], 1
    %493 = vsyncpa %s492, 1

</llo_original>
